<compile_context>
chip_gen: v7x
topology: tpu7x:2x2x1
jax: 0.10.0
libtpu: 0.0.40
codegen_flags: <defaults>
</compile_context>

<pallas_src>
import functools
import math

import jax
import jax.numpy as jnp
from jax.experimental import pallas as pl
from jax.experimental.pallas import tpu as pltpu

_EPS = 1e-12  # torch.nn.functional.normalize default eps
_PIO2 = 1.5707963267948966


def _round_up(x, mult):
    return ((x + mult - 1) // mult) * mult


def _asin_poly(z):
    """Cephes asinf for z in [0, 1]: VPU mul/add + one EUP sqrt (no lax.asin)."""
    big = z > 0.5
    w2 = jnp.where(big, 0.5 * (1.0 - z), z * z)
    s = jnp.where(big, jnp.sqrt(w2), z)
    p = ((((4.2163199048e-2 * w2 + 2.4181311049e-2) * w2
           + 4.5470025998e-2) * w2 + 7.4953002686e-2) * w2
         + 1.6666752422e-1) * w2 * s + s
    return jnp.where(big, jnp.float32(_PIO2) - 2.0 * p, p)


def _make_prompt_kernel(n, m, tm, tn):
    """Fused kernel: gram -> spherical distance -> mask -> (8,128) partial sum.

    x_ref : (tm, D) VMEM tile of row-normalized `input`  (rows are unit/zero)
    e_ref : (tn, D) VMEM tile of row-normalized `embed`
    out_ref: (8, 128) accumulator for row-tile i (accumulated over the M axis)
    """

    def kernel(x_ref, e_ref, out_ref):
        i = pl.program_id(0)
        j = pl.program_id(1)

        @pl.when(j == 0)
        def _():
            out_ref[...] = jnp.zeros_like(out_ref)

        # Gram matrix on the MXU: contract the feature axis -> (tm, tn) f32.
        g = jax.lax.dot_general(
            x_ref[...], e_ref[...], (((1,), (1,)), ((), ())),
            preferred_element_type=jnp.float32,
            precision=jax.lax.Precision.HIGHEST)

        # For unit rows: ||x - e|| / 2 = sqrt((1 - g) / 2); clip fp overshoot.
        z = jnp.sqrt(jnp.clip((1.0 - g) * 0.5, 0.0, 1.0))
        a = _asin_poly(z)
        dist = 2.0 * a * a                                   # (tm, tn) f32

        # Mask padded rows/cols out of the mean.
        row = jax.lax.broadcasted_iota(jnp.int32, (tm, tn), 0) + i * tm
        col = jax.lax.broadcasted_iota(jnp.int32, (tm, tn), 1) + j * tn
        dist = jnp.where((row < n) & (col < m), dist, 0.0)

        # Fold the (tm, tn) tile down to a single (8, 128) vreg of partial sums
        # (static, tile-aligned slices only; no cross-lane reshapes).
        part = dist[0:8, :]
        for a_ in range(1, tm // 8):
            part = part + dist[a_ * 8:(a_ + 1) * 8, :]
        acc = part[:, 0:128]
        for b_ in range(1, tn // 128):
            acc = acc + part[:, b_ * 128:(b_ + 1) * 128]

        out_ref[...] += acc

    return kernel


@functools.partial(jax.jit, static_argnames=("tm", "tn"))
def prompt_forward(inp, embed, weight=1.0, stop=float("-inf"), *, tm=256, tn=512):
    """JAX/Pallas equivalent of Prompt.forward(input) (forward pass only)."""
    n, d = inp.shape
    m, d2 = embed.shape
    assert d == d2, "feature dims must match"

    # --- Row normalization hoisted out of the kernel (done once per array).
    # F.normalize(dim=-1): x / max(||x||, eps) == x * rsqrt(max(||x||^2, eps^2))
    def _normalize(a):
        af = a.astype(jnp.float32)
        inv = jax.lax.rsqrt(
            jnp.maximum(jnp.sum(af * af, axis=-1, keepdims=True), _EPS * _EPS))
        out = af * inv
        # Keep bf16 inputs bf16 on the MXU (full rate); f32 stays f32.
        return out.astype(a.dtype) if a.dtype == jnp.bfloat16 else out

    x_n = _normalize(inp)
    e_n = _normalize(embed)

    # --- Tile selection: only rows are padded (D stays at full extent in the
    # BlockSpec).  Unaligned N/M are padded UP to tile multiples instead of
    # shrinking the tiles.
    tm = _round_up(max(8, min(tm, _round_up(n, 8))), 8)
    tn = _round_up(max(128, min(tn, _round_up(m, 128))), 128)
    n_pad = _round_up(n, tm)
    m_pad = _round_up(m, tn)
    grid_n = n_pad // tm
    grid_m = m_pad // tn

    if n_pad != n:
        x_n = jnp.pad(x_n, ((0, n_pad - n), (0, 0)))
    if m_pad != m:
        e_n = jnp.pad(e_n, ((0, m_pad - m), (0, 0)))

    itemsize = jnp.dtype(x_n.dtype).itemsize
    cost = pl.CostEstimate(
        flops=2 * n_pad * m_pad * d + 16 * n_pad * m_pad,
        transcendentals=2 * n_pad * m_pad,
        bytes_accessed=itemsize * (n_pad * d + grid_n * m_pad * d)
        + 4 * grid_n * 8 * 128,
    )

    partials = pl.pallas_call(
        _make_prompt_kernel(n, m, tm, tn),
        out_shape=jax.ShapeDtypeStruct((grid_n * 8, 128), jnp.float32),
        grid=(grid_n, grid_m),
        in_specs=[
            pl.BlockSpec((tm, d), lambda i, j: (i, 0)),
            pl.BlockSpec((tn, d), lambda i, j: (j, 0)),
        ],
        out_specs=pl.BlockSpec((8, 128), lambda i, j: (i, 0)),
        compiler_params=pltpu.CompilerParams(
            dimension_semantics=("parallel", "arbitrary"),
            vmem_limit_bytes=32 * 1024 * 1024),
        cost_estimate=cost,
    )(x_n, e_n)

    # Tiny epilogue: sum of grid_n*8*128 partials, mean, weight sign/abs.
    w = jnp.asarray(weight, jnp.float32)
    mean_raw = jnp.sum(partials) / (n * m)
    # ReplaceGrad.forward(x, max(x, stop)) == x; `stop` only affects backward.
    del stop
    return jnp.abs(w) * (jnp.sign(w) * mean_raw)


def _prompt_ref(inp, embed, weight):
    """Pure-jnp reference mirroring the PyTorch forward."""
    x_n = inp / jnp.maximum(jnp.linalg.norm(inp, axis=-1, keepdims=True), _EPS)
    e_n = embed / jnp.maximum(jnp.linalg.norm(embed, axis=-1, keepdims=True), _EPS)
    nrm = jnp.linalg.norm(x_n[:, None, :] - e_n[None, :, :], axis=-1)
    w = jnp.asarray(weight, jnp.float32)
    dists = jnp.square(jnp.arcsin(nrm / 2.0)) * 2.0 * jnp.sign(w)
    return jnp.abs(w) * jnp.mean(dists)


if __name__ == "__main__":
    key = jax.random.PRNGKey(0)
    k_in, k_emb = jax.random.split(key)

    # Small shapes consistent with the module (CLIP-style embedding rows),
    # deliberately unaligned to exercise the row-padding / masking path.
    N, M, D = 13, 6, 96
    inp = jax.random.normal(k_in, (N, D), dtype=jnp.float32)      # "input"
    embed = jax.random.normal(k_emb, (M, D), dtype=jnp.float32)   # buffer 'embed'
    weight = 0.5                                                  # buffer 'weight'
    stop = float("-inf")                                          # buffer 'stop'

    out = jax.block_until_ready(prompt_forward(inp, embed, weight, stop))
    ref = jax.block_until_ready(_prompt_ref(inp, embed, weight))
    assert out.shape == (), f"expected scalar, got {out.shape}"
    assert jnp.allclose(out, ref, atol=2e-5, rtol=2e-5), (float(out), float(ref))

    # Second case forces a multi-step (3, 2) grid to exercise the M-axis
    # accumulator, the per-row-tile partial sums, and a negative weight.
    N2, M2, D2 = 20, 200, 64
    inp2 = jax.random.normal(jax.random.PRNGKey(1), (N2, D2), dtype=jnp.float32)
    emb2 = jax.random.normal(jax.random.PRNGKey(2), (M2, D2), dtype=jnp.float32)
    out2 = jax.block_until_ready(prompt_forward(inp2, emb2, -1.5, stop, tm=8, tn=128))
    ref2 = jax.block_until_ready(_prompt_ref(inp2, emb2, -1.5))
    assert jnp.allclose(out2, ref2, atol=2e-5, rtol=2e-5), (float(out2), float(ref2))

    print("KERNEL_OK")
</pallas_src>

<mosaic_0001>
module attributes {stable_mosaic.version = 11 : i64} {
  func.func @kernel(%arg0: i32, %arg1: i32, %arg2: memref<16x96xf32, #tpu.memory_space<vmem>>, %arg3: memref<128x96xf32, #tpu.memory_space<vmem>>, %arg4: memref<8x128xf32, #tpu.memory_space<vmem>>) attributes {dimension_semantics = [#tpu.dimension_semantics<parallel>, #tpu.dimension_semantics<arbitrary>], iteration_bounds = array<i64: 1, 1>, scalar_prefetch = 0 : i64, scratch_operands = 0 : i64, tpu.core_type = #tpu.core_type<tc>, window_params = [{transform_indices = @transform_0, window_bounds = array<i64: 16, 96>}, {transform_indices = @transform_1, window_bounds = array<i64: 128, 96>}, {transform_indices = @transform_2, window_bounds = array<i64: 8, 128>}]} {
    %c0_i32 = arith.constant 0 : i32
    %0 = arith.cmpi eq, %arg1, %c0_i32 : i32
    %1 = arith.extui %0 : i1 to i32
    %c0_i32_0 = arith.constant 0 : i32
    %2 = arith.cmpi ne, %1, %c0_i32_0 : i32
    scf.if %2 {
      %cst_24 = arith.constant 0.000000e+00 : f32
      %70 = vector.broadcast %cst_24 : f32 to vector<8x128xf32>
      %c0_25 = arith.constant 0 : index
      %c0_26 = arith.constant 0 : index
      %71 = vector.load %arg4[%c0_25, %c0_26] : memref<8x128xf32, #tpu.memory_space<vmem>>, vector<8x128xf32>
      tpu.vector_store %arg4[%c0_25, %c0_26], %70 {strides = array<i32>} : memref<8x128xf32, #tpu.memory_space<vmem>>, vector<8x128xf32>,
    } else {
    }
    %c0 = arith.constant 0 : index
    %c0_1 = arith.constant 0 : index
    %3 = vector.load %arg2[%c0, %c0_1] : memref<16x96xf32, #tpu.memory_space<vmem>>, vector<16x96xf32>
    %c0_2 = arith.constant 0 : index
    %c0_3 = arith.constant 0 : index
    %4 = vector.load %arg3[%c0_2, %c0_3] : memref<128x96xf32, #tpu.memory_space<vmem>>, vector<128x96xf32>
    %cst = arith.constant dense<0.000000e+00> : vector<16x128xf32>
    %5 = tpu.matmul %3, %4, %cst {dimension_numbers = #tpu.dot_dimension_numbers<[1], [1], [0], [0], [0, 0, 1, 0], [], []>, precision = #tpu.contract_precision<fp32>} : vector<16x96xf32>, vector<128x96xf32>, vector<16x128xf32> -> vector<16x128xf32>
    %cst_4 = arith.constant 1.000000e+00 : f32
    %6 = vector.broadcast %cst_4 : f32 to vector<16x128xf32>
    %7 = arith.subf %6, %5 : vector<16x128xf32>
    %cst_5 = arith.constant 5.000000e-01 : f32
    %8 = vector.broadcast %cst_5 : f32 to vector<16x128xf32>
    %9 = arith.mulf %7, %8 : vector<16x128xf32>
    %cst_6 = arith.constant 0.000000e+00 : f32
    %cst_7 = arith.constant 1.000000e+00 : f32
    %10 = vector.broadcast %cst_6 : f32 to vector<16x128xf32>
    %11 = arith.maximumf %10, %9 : vector<16x128xf32>
    %12 = vector.broadcast %cst_7 : f32 to vector<16x128xf32>
    %13 = arith.minimumf %12, %11 : vector<16x128xf32>
    %14 = math.sqrt %13 : vector<16x128xf32>
    %cst_8 = arith.constant 5.000000e-01 : f32
    %15 = vector.broadcast %cst_8 : f32 to vector<16x128xf32>
    %16 = arith.cmpf ogt, %14, %15 : vector<16x128xf32>
    %cst_9 = arith.constant 1.000000e+00 : f32
    %17 = vector.broadcast %cst_9 : f32 to vector<16x128xf32>
    %18 = arith.subf %17, %14 : vector<16x128xf32>
    %cst_10 = arith.constant 5.000000e-01 : f32
    %19 = vector.broadcast %cst_10 : f32 to vector<16x128xf32>
    %20 = arith.mulf %19, %18 : vector<16x128xf32>
    %21 = arith.mulf %14, %14 : vector<16x128xf32>
    %22 = arith.select %16, %20, %21 : vector<16x128xi1>, vector<16x128xf32>
    %23 = math.sqrt %22 : vector<16x128xf32>
    %24 = arith.select %16, %23, %14 : vector<16x128xi1>, vector<16x128xf32>
    %cst_11 = arith.constant 4.216320e-02 : f32
    %25 = vector.broadcast %cst_11 : f32 to vector<16x128xf32>
    %26 = arith.mulf %25, %22 : vector<16x128xf32>
    %cst_12 = arith.constant 0.024181312 : f32
    %27 = vector.broadcast %cst_12 : f32 to vector<16x128xf32>
    %28 = arith.addf %26, %27 : vector<16x128xf32>
    %29 = arith.mulf %28, %22 : vector<16x128xf32>
    %cst_13 = arith.constant 0.0454700254 : f32
    %30 = vector.broadcast %cst_13 : f32 to vector<16x128xf32>
    %31 = arith.addf %29, %30 : vector<16x128xf32>
    %32 = arith.mulf %31, %22 : vector<16x128xf32>
    %cst_14 = arith.constant 0.0749530047 : f32
    %33 = vector.broadcast %cst_14 : f32 to vector<16x128xf32>
    %34 = arith.addf %32, %33 : vector<16x128xf32>
    %35 = arith.mulf %34, %22 : vector<16x128xf32>
    %cst_15 = arith.constant 0.166667521 : f32
    %36 = vector.broadcast %cst_15 : f32 to vector<16x128xf32>
    %37 = arith.addf %35, %36 : vector<16x128xf32>
    %38 = arith.mulf %37, %22 : vector<16x128xf32>
    %39 = arith.mulf %38, %24 : vector<16x128xf32>
    %40 = arith.addf %39, %24 : vector<16x128xf32>
    %cst_16 = arith.constant 2.000000e+00 : f32
    %41 = vector.broadcast %cst_16 : f32 to vector<16x128xf32>
    %42 = arith.mulf %41, %40 : vector<16x128xf32>
    %cst_17 = arith.constant 1.57079637 : f32
    %43 = vector.broadcast %cst_17 : f32 to vector<16x128xf32>
    %44 = arith.subf %43, %42 : vector<16x128xf32>
    %45 = arith.select %16, %44, %40 : vector<16x128xi1>, vector<16x128xf32>
    %cst_18 = arith.constant 2.000000e+00 : f32
    %46 = vector.broadcast %cst_18 : f32 to vector<16x128xf32>
    %47 = arith.mulf %46, %45 : vector<16x128xf32>
    %48 = arith.mulf %47, %45 : vector<16x128xf32>
    %49 = tpu.iota {dimensions = array<i32: 0>} : vector<16x128xi32>
    %c16_i32 = arith.constant 16 : i32
    %50 = arith.muli %arg0, %c16_i32 : i32
    %51 = vector.broadcast %50 : i32 to vector<16x128xi32>
    %52 = arith.addi %49, %51 : vector<16x128xi32>
    %53 = tpu.iota {dimensions = array<i32: 1>} : vector<16x128xi32>
    %c128_i32 = arith.constant 128 : i32
    %54 = arith.muli %arg1, %c128_i32 : i32
    %55 = vector.broadcast %54 : i32 to vector<16x128xi32>
    %56 = arith.addi %53, %55 : vector<16x128xi32>
    %c13_i32 = arith.constant 13 : i32
    %57 = vector.broadcast %c13_i32 : i32 to vector<16x128xi32>
    %58 = arith.cmpi slt, %52, %57 : vector<16x128xi32>
    %c6_i32 = arith.constant 6 : i32
    %59 = vector.broadcast %c6_i32 : i32 to vector<16x128xi32>
    %60 = arith.cmpi slt, %56, %59 : vector<16x128xi32>
    %61 = arith.andi %58, %60 : vector<16x128xi1>
    %cst_19 = arith.constant 0.000000e+00 : f32
    %62 = vector.broadcast %cst_19 : f32 to vector<16x128xf32>
    %63 = arith.select %61, %48, %62 : vector<16x128xi1>, vector<16x128xf32>
    %64 = vector.extract_strided_slice %63 {offsets = [0, 0], sizes = [8, 128], strides = [1, 1]} : vector<16x128xf32> to vector<8x128xf32>
    %65 = vector.extract_strided_slice %63 {offsets = [8, 0], sizes = [8, 128], strides = [1, 1]} : vector<16x128xf32> to vector<8x128xf32>
    %66 = arith.addf %64, %65 : vector<8x128xf32>
    %c0_20 = arith.constant 0 : index
    %c0_21 = arith.constant 0 : index
    %67 = vector.load %arg4[%c0_20, %c0_21] : memref<8x128xf32, #tpu.memory_space<vmem>>, vector<8x128xf32>
    %68 = arith.addf %67, %66 : vector<8x128xf32>
    %c0_22 = arith.constant 0 : index
    %c0_23 = arith.constant 0 : index
    %69 = vector.load %arg4[%c0_22, %c0_23] : memref<8x128xf32, #tpu.memory_space<vmem>>, vector<8x128xf32>
    tpu.vector_store %arg4[%c0_22, %c0_23], %68 {strides = array<i32>} : memref<8x128xf32, #tpu.memory_space<vmem>>, vector<8x128xf32>,
    return
  }
  func.func @transform_0(%arg0: i32, %arg1: i32) -> (i32, i32) {
    %c0_i32 = arith.constant 0 : i32
    %c0_i32_0 = arith.constant 0 : i32
    return %arg0, %c0_i32 : i32, i32
  }
  func.func @transform_1(%arg0: i32, %arg1: i32) -> (i32, i32) {
    %c0_i32 = arith.constant 0 : i32
    %c0_i32_0 = arith.constant 0 : i32
    return %arg1, %c0_i32 : i32, i32
  }
  func.func @transform_2(%arg0: i32, %arg1: i32) -> (i32, i32) {
    %c0_i32 = arith.constant 0 : i32
    %c0_i32_0 = arith.constant 0 : i32
    return %arg0, %c0_i32 : i32, i32
  }
}

</mosaic_0001>

<llo_original>
// kernel: prompt_forward.1
$region0: #{prompt_forward.1}
  #allocation0 [shape = 'u32[]', space=smem, size = 0x4, offset = 0x4, fixed_abs, tag = 'smem constant byte address 0x4 - core index']
  #allocation1 [shape = 'u32[144,128]{1,0:T(1,128)}', space=vmem, size = 0x12000, scoped, tag = 'internal scratch']
  %s0 = inlined_call_operand.vmem [shape: f32[16,96], index: 0, kind: input, shape index: {}]
  %s1 = inlined_call_operand.vmem [shape: f32[128,96], index: 1, kind: input, shape index: {}]
  %s2 = inlined_call_operand.vmem [shape: f32[8,128], index: 2, kind: output, shape index: {}]
  %s3 = sld [smem:[#allocation0]]
  $region22: #{prompt_forward.1} parent=0
    _
  %s5 = ssub.s32 1, %s3
  %s6 = scalar_select 0, %s5, %s3
  // Predicated region
  $region2: #{prompt_forward.1} parent=0 // pred_check
    _
  $region3: #{prompt_forward.1} parent=0 // pred_check_branch
    %8 = sbr.rel (0) target = $region5
  $region4: #{prompt_forward.1} parent=0 // pred_region
    _
  $region5: #{prompt_forward.1} parent=0 // pred_fallthru
    _
  // Predicated region
  $region6: #{prompt_forward.1} parent=0 // pred_check
    _
  $region7: #{prompt_forward.1} parent=0 // pred_check_branch
    %10 = sbr.rel (0) target = $region9
  $region8: #{prompt_forward.1} parent=0 // pred_region
    _
  $region9: #{prompt_forward.1} parent=0 // pred_fallthru
    _
  %p11 = scmp.eq.s32.totalorder 0, 0
  // Predicated region
  $region10: #{prompt_forward.1} parent=0 // pred_check
    %p12 = pneg %p11
  $region11: #{prompt_forward.1} parent=0 // pred_check_branch
    %14 = sbr.rel (%p12) target = $region13
  $region12: #{prompt_forward.1} parent=0 // pred_region
    %15 = vst [vmem:[%s2] sm:$0xff] 0.0
  $region13: #{prompt_forward.1} parent=0 // pred_fallthru
    _
  %v16 = vld [vmem:[%s0] sm:$0xff]
  %v17 = vld [vmem:[%s0 + $0x8] sm:$0xff]
  %v18 = vld [vmem:[%s1] sm:$0xff]
  %v19 = vld [vmem:[%s1 + $0x8] sm:$0xff]
  %v20 = vld [vmem:[%s1 + $0x10] sm:$0xff]
  %v21 = vld [vmem:[%s1 + $0x18] sm:$0xff]
  %v22 = vld [vmem:[%s1 + $0x20] sm:$0xff]
  %v23 = vld [vmem:[%s1 + $0x28] sm:$0xff]
  %v24 = vld [vmem:[%s1 + $0x30] sm:$0xff]
  %v25 = vld [vmem:[%s1 + $0x38] sm:$0xff]
  %v26 = vld [vmem:[%s1 + $0x40] sm:$0xff]
  %v27 = vld [vmem:[%s1 + $0x48] sm:$0xff]
  %v28 = vld [vmem:[%s1 + $0x50] sm:$0xff]
  %v29 = vld [vmem:[%s1 + $0x58] sm:$0xff]
  %v30 = vld [vmem:[%s1 + $0x60] sm:$0xff]
  %v31 = vld [vmem:[%s1 + $0x68] sm:$0xff]
  %v32 = vld [vmem:[%s1 + $0x70] sm:$0xff]
  %v33 = vld [vmem:[%s1 + $0x78] sm:$0xff]
  %vm34 = vcmask 785408
  %v36 = vsel %vm34, %v16, 0
  %v39 = vsel %vm34, %v17, 0
  %v42 = vsel %vm34, %v18, 0
  %v45 = vsel %vm34, %v19, 0
  %v48 = vsel %vm34, %v20, 0
  %v51 = vsel %vm34, %v21, 0
  %v54 = vsel %vm34, %v22, 0
  %v57 = vsel %vm34, %v23, 0
  %v60 = vsel %vm34, %v24, 0
  %v63 = vsel %vm34, %v25, 0
  %v66 = vsel %vm34, %v26, 0
  %v69 = vsel %vm34, %v27, 0
  %v72 = vsel %vm34, %v28, 0
  %v75 = vsel %vm34, %v29, 0
  %v78 = vsel %vm34, %v30, 0
  %v81 = vsel %vm34, %v31, 0
  %v84 = vsel %vm34, %v32, 0
  %v87 = vsel %vm34, %v33, 0
  %89 = vmatprep.subr.mxu0 0.0
  %v90 = vand.u32 %v42, 4294901760
  %91 = vmatpush1.xpose.msra.mxu0 %v90
  %92 = vmatprep.subr.mxu0 0.0
  %v93 = vand.u32 %v45, 4294901760
  %94 = vmatpush1.xpose.msra.mxu0 %v93
  %95 = vmatprep.subr.mxu0 0.0
  %v96 = vand.u32 %v48, 4294901760
  %97 = vmatpush1.xpose.msra.mxu0 %v96
  %98 = vmatprep.subr.mxu0 0.0
  %v99 = vand.u32 %v51, 4294901760
  %100 = vmatpush1.xpose.msra.mxu0 %v99
  %101 = vmatprep.subr.mxu0 0.0
  %v102 = vand.u32 %v54, 4294901760
  %103 = vmatpush1.xpose.msra.mxu0 %v102
  %104 = vmatprep.subr.mxu0 0.0
  %v105 = vand.u32 %v57, 4294901760
  %106 = vmatpush1.xpose.msra.mxu0 %v105
  %107 = vmatprep.subr.mxu0 0.0
  %v108 = vand.u32 %v60, 4294901760
  %109 = vmatpush1.xpose.msra.mxu0 %v108
  %110 = vmatprep.subr.mxu0 0.0
  %v111 = vand.u32 %v63, 4294901760
  %112 = vmatpush1.xpose.msra.mxu0 %v111
  %113 = vmatprep.subr.mxu0 0.0
  %v114 = vand.u32 %v66, 4294901760
  %115 = vmatpush1.xpose.msra.mxu0 %v114
  %116 = vmatprep.subr.mxu0 0.0
  %v117 = vand.u32 %v69, 4294901760
  %118 = vmatpush1.xpose.msra.mxu0 %v117
  %119 = vmatprep.subr.mxu0 0.0
  %v120 = vand.u32 %v72, 4294901760
  %121 = vmatpush1.xpose.msra.mxu0 %v120
  %122 = vmatprep.subr.mxu0 0.0
  %v123 = vand.u32 %v75, 4294901760
  %124 = vmatpush1.xpose.msra.mxu0 %v123
  %125 = vmatprep.subr.mxu0 0.0
  %v126 = vand.u32 %v78, 4294901760
  %127 = vmatpush1.xpose.msra.mxu0 %v126
  %128 = vmatprep.subr.mxu0 0.0
  %v129 = vand.u32 %v81, 4294901760
  %130 = vmatpush1.xpose.msra.mxu0 %v129
  %131 = vmatprep.subr.mxu0 0.0
  %v132 = vand.u32 %v84, 4294901760
  %133 = vmatpush1.xpose.msra.mxu0 %v132
  %134 = vmatprep.subr.mxu0 0.0
  %v135 = vand.u32 %v87, 4294901760
  %136 = vmatpush1.xpose.msra.mxu0 %v135
  %137 = vmatprep.subr.mxu0 0.0
  %138 = vmatpush1.xpose.msra.mxu0 0.0
  %139 = vmatprep.subr.mxu0 0.0
  %140 = vmatpush1.xpose.msra.mxu0 0.0
  %141 = vmatprep.subr.mxu0 0.0
  %142 = vmatpush1.xpose.msra.mxu0 0.0
  %143 = vmatprep.subr.mxu0 0.0
  %144 = vmatpush1.xpose.msra.mxu0 0.0
  %145 = vmatprep.subr.mxu0 0.0
  %146 = vmatpush1.xpose.msra.mxu0 0.0
  %147 = vmatprep.subr.mxu0 0.0
  %148 = vmatpush1.xpose.msra.mxu0 0.0
  %149 = vmatprep.subr.mxu0 0.0
  %150 = vmatpush1.xpose.msra.mxu0 0.0
  %151 = vmatprep.subr.mxu0 0.0
  %152 = vmatpush1.xpose.msra.mxu0 0.0
  %153 = vmatprep.subr.mxu0 0.0
  %154 = vmatpush1.xpose.msra.mxu0 0.0
  %155 = vmatprep.subr.mxu0 0.0
  %156 = vmatpush1.xpose.msra.mxu0 0.0
  %157 = vmatprep.subr.mxu0 0.0
  %158 = vmatpush1.xpose.msra.mxu0 0.0
  %159 = vmatprep.subr.mxu0 0.0
  %160 = vmatpush1.xpose.msra.mxu0 0.0
  %161 = vmatprep.subr.mxu0 0.0
  %162 = vmatpush1.xpose.msra.mxu0 0.0
  %163 = vmatprep.subr.mxu0 0.0
  %164 = vmatpush1.xpose.msra.mxu0 0.0
  %165 = vmatprep.subr.mxu0 0.0
  %166 = vmatpush1.xpose.msra.mxu0 0.0
  %167 = vmatprep.subr.mxu0 0.0
  %168 = vmatpush1.xpose.msra.mxu0 0.0
  %169 = vmatprep.mubr.f32.mxu0 0.0
  %v170 = vand.u32 %v36, 4294901760
  %v171 = vsub.f32 %v36, %v170
  %v172 = vand.u32 %v171, 4294901760
  %v173 = vsub.f32 %v171, %v172
  %v174 = vand.u32 %v173, 4294901760
  %175 = vmatmul.mubr.f32.gmra.mrb[0].mxu0 %v174
  %v176 = vpop.f32.mrb[0].mxu0
  %v177 = vadd.f32 0.0, %v176
  %v178 = vpop.f32.mrb[0].mxu0
  %179 = vmatprep.mubr.f32.mxu0 0.0
  %v180 = vand.u32 %v39, 4294901760
  %v181 = vsub.f32 %v39, %v180
  %v182 = vand.u32 %v181, 4294901760
  %v183 = vsub.f32 %v181, %v182
  %v184 = vand.u32 %v183, 4294901760
  %185 = vmatmul.mubr.f32.gmra.mrb[0].mxu0 %v184
  %v186 = vpop.f32.mrb[0].mxu0
  %v187 = vadd.f32 0.0, %v186
  %v188 = vpop.f32.mrb[0].mxu0
  %189 = vdwg.mxu0
  %190 = vmatprep.subr.mxu0 0.0
  %v191 = vand.u32 %v42, 4294901760
  %v192 = vsub.f32 %v42, %v191
  %v193 = vand.u32 %v192, 4294901760
  %v194 = vsub.f32 %v192, %v193
  %v195 = vand.u32 %v194, 4294901760
  %196 = vmatpush1.xpose.msra.mxu0 %v195
  %197 = vmatprep.subr.mxu0 0.0
  %v198 = vand.u32 %v45, 4294901760
  %v199 = vsub.f32 %v45, %v198
  %v200 = vand.u32 %v199, 4294901760
  %v201 = vsub.f32 %v199, %v200
  %v202 = vand.u32 %v201, 4294901760
  %203 = vmatpush1.xpose.msra.mxu0 %v202
  %204 = vmatprep.subr.mxu0 0.0
  %v205 = vand.u32 %v48, 4294901760
  %v206 = vsub.f32 %v48, %v205
  %v207 = vand.u32 %v206, 4294901760
  %v208 = vsub.f32 %v206, %v207
  %v209 = vand.u32 %v208, 4294901760
  %210 = vmatpush1.xpose.msra.mxu0 %v209
  %211 = vmatprep.subr.mxu0 0.0
  %v212 = vand.u32 %v51, 4294901760
  %v213 = vsub.f32 %v51, %v212
  %v214 = vand.u32 %v213, 4294901760
  %v215 = vsub.f32 %v213, %v214
  %v216 = vand.u32 %v215, 4294901760
  %217 = vmatpush1.xpose.msra.mxu0 %v216
  %218 = vmatprep.subr.mxu0 0.0
  %v219 = vand.u32 %v54, 4294901760
  %v220 = vsub.f32 %v54, %v219
  %v221 = vand.u32 %v220, 4294901760
  %v222 = vsub.f32 %v220, %v221
  %v223 = vand.u32 %v222, 4294901760
  %224 = vmatpush1.xpose.msra.mxu0 %v223
  %225 = vmatprep.subr.mxu0 0.0
  %v226 = vand.u32 %v57, 4294901760
  %v227 = vsub.f32 %v57, %v226
  %v228 = vand.u32 %v227, 4294901760
  %v229 = vsub.f32 %v227, %v228
  %v230 = vand.u32 %v229, 4294901760
  %231 = vmatpush1.xpose.msra.mxu0 %v230
  %232 = vmatprep.subr.mxu0 0.0
  %v233 = vand.u32 %v60, 4294901760
  %v234 = vsub.f32 %v60, %v233
  %v235 = vand.u32 %v234, 4294901760
  %v236 = vsub.f32 %v234, %v235
  %v237 = vand.u32 %v236, 4294901760
  %238 = vmatpush1.xpose.msra.mxu0 %v237
  %239 = vmatprep.subr.mxu0 0.0
  %v240 = vand.u32 %v63, 4294901760
  %v241 = vsub.f32 %v63, %v240
  %v242 = vand.u32 %v241, 4294901760
  %v243 = vsub.f32 %v241, %v242
  %v244 = vand.u32 %v243, 4294901760
  %245 = vmatpush1.xpose.msra.mxu0 %v244
  %246 = vmatprep.subr.mxu0 0.0
  %v247 = vand.u32 %v66, 4294901760
  %v248 = vsub.f32 %v66, %v247
  %v249 = vand.u32 %v248, 4294901760
  %v250 = vsub.f32 %v248, %v249
  %v251 = vand.u32 %v250, 4294901760
  %252 = vmatpush1.xpose.msra.mxu0 %v251
  %253 = vmatprep.subr.mxu0 0.0
  %v254 = vand.u32 %v69, 4294901760
  %v255 = vsub.f32 %v69, %v254
  %v256 = vand.u32 %v255, 4294901760
  %v257 = vsub.f32 %v255, %v256
  %v258 = vand.u32 %v257, 4294901760
  %259 = vmatpush1.xpose.msra.mxu0 %v258
  %260 = vmatprep.subr.mxu0 0.0
  %v261 = vand.u32 %v72, 4294901760
  %v262 = vsub.f32 %v72, %v261
  %v263 = vand.u32 %v262, 4294901760
  %v264 = vsub.f32 %v262, %v263
  %v265 = vand.u32 %v264, 4294901760
  %266 = vmatpush1.xpose.msra.mxu0 %v265
  %267 = vmatprep.subr.mxu0 0.0
  %v268 = vand.u32 %v75, 4294901760
  %v269 = vsub.f32 %v75, %v268
  %v270 = vand.u32 %v269, 4294901760
  %v271 = vsub.f32 %v269, %v270
  %v272 = vand.u32 %v271, 4294901760
  %273 = vmatpush1.xpose.msra.mxu0 %v272
  %274 = vmatprep.subr.mxu0 0.0
  %v275 = vand.u32 %v78, 4294901760
  %v276 = vsub.f32 %v78, %v275
  %v277 = vand.u32 %v276, 4294901760
  %v278 = vsub.f32 %v276, %v277
  %v279 = vand.u32 %v278, 4294901760
  %280 = vmatpush1.xpose.msra.mxu0 %v279
  %281 = vmatprep.subr.mxu0 0.0
  %v282 = vand.u32 %v81, 4294901760
  %v283 = vsub.f32 %v81, %v282
  %v284 = vand.u32 %v283, 4294901760
  %v285 = vsub.f32 %v283, %v284
  %v286 = vand.u32 %v285, 4294901760
  %287 = vmatpush1.xpose.msra.mxu0 %v286
  %288 = vmatprep.subr.mxu0 0.0
  %v289 = vand.u32 %v84, 4294901760
  %v290 = vsub.f32 %v84, %v289
  %v291 = vand.u32 %v290, 4294901760
  %v292 = vsub.f32 %v290, %v291
  %v293 = vand.u32 %v292, 4294901760
  %294 = vmatpush1.xpose.msra.mxu0 %v293
  %295 = vmatprep.subr.mxu0 0.0
  %v296 = vand.u32 %v87, 4294901760
  %v297 = vsub.f32 %v87, %v296
  %v298 = vand.u32 %v297, 4294901760
  %v299 = vsub.f32 %v297, %v298
  %v300 = vand.u32 %v299, 4294901760
  %301 = vmatpush1.xpose.msra.mxu0 %v300
  %302 = vmatprep.subr.mxu0 0.0
  %303 = vmatpush1.xpose.msra.mxu0 0.0
  %304 = vmatprep.subr.mxu0 0.0
  %305 = vmatpush1.xpose.msra.mxu0 0.0
  %306 = vmatprep.subr.mxu0 0.0
  %307 = vmatpush1.xpose.msra.mxu0 0.0
  %308 = vmatprep.subr.mxu0 0.0
  %309 = vmatpush1.xpose.msra.mxu0 0.0
  %310 = vmatprep.subr.mxu0 0.0
  %311 = vmatpush1.xpose.msra.mxu0 0.0
  %312 = vmatprep.subr.mxu0 0.0
  %313 = vmatpush1.xpose.msra.mxu0 0.0
  %314 = vmatprep.subr.mxu0 0.0
  %315 = vmatpush1.xpose.msra.mxu0 0.0
  %316 = vmatprep.subr.mxu0 0.0
  %317 = vmatpush1.xpose.msra.mxu0 0.0
  %318 = vmatprep.subr.mxu0 0.0
  %319 = vmatpush1.xpose.msra.mxu0 0.0
  %320 = vmatprep.subr.mxu0 0.0
  %321 = vmatpush1.xpose.msra.mxu0 0.0
  %322 = vmatprep.subr.mxu0 0.0
  %323 = vmatpush1.xpose.msra.mxu0 0.0
  %324 = vmatprep.subr.mxu0 0.0
  %325 = vmatpush1.xpose.msra.mxu0 0.0
  %326 = vmatprep.subr.mxu0 0.0
  %327 = vmatpush1.xpose.msra.mxu0 0.0
  %328 = vmatprep.subr.mxu0 0.0
  %329 = vmatpush1.xpose.msra.mxu0 0.0
  %330 = vmatprep.subr.mxu0 0.0
  %331 = vmatpush1.xpose.msra.mxu0 0.0
  %332 = vmatprep.subr.mxu0 0.0
  %333 = vmatpush1.xpose.msra.mxu0 0.0
  %334 = vmatprep.mubr.f32.mxu0 0.0
  %v335 = vand.u32 %v36, 4294901760
  %336 = vmatmul.mubr.f32.gmra.mrb[0].mxu0 %v335
  %v337 = vpop.f32.mrb[0].mxu0
  %v338 = vadd.f32 %v177, %v337
  %v339 = vpop.f32.mrb[0].mxu0
  %340 = vmatprep.mubr.f32.mxu0 0.0
  %v341 = vand.u32 %v39, 4294901760
  %342 = vmatmul.mubr.f32.gmra.mrb[0].mxu0 %v341
  %v343 = vpop.f32.mrb[0].mxu0
  %v344 = vadd.f32 %v187, %v343
  %v345 = vpop.f32.mrb[0].mxu0
  %346 = vdwg.mxu0
  %347 = vmatprep.subr.mxu0 0.0
  %v348 = vand.u32 %v42, 4294901760
  %v349 = vsub.f32 %v42, %v348
  %350 = vmatpush1.xpose.msra.mxu0 %v349
  %351 = vmatprep.subr.mxu0 0.0
  %v352 = vand.u32 %v45, 4294901760
  %v353 = vsub.f32 %v45, %v352
  %354 = vmatpush1.xpose.msra.mxu0 %v353
  %355 = vmatprep.subr.mxu0 0.0
  %v356 = vand.u32 %v48, 4294901760
  %v357 = vsub.f32 %v48, %v356
  %358 = vmatpush1.xpose.msra.mxu0 %v357
  %359 = vmatprep.subr.mxu0 0.0
  %v360 = vand.u32 %v51, 4294901760
  %v361 = vsub.f32 %v51, %v360
  %362 = vmatpush1.xpose.msra.mxu0 %v361
  %363 = vmatprep.subr.mxu0 0.0
  %v364 = vand.u32 %v54, 4294901760
  %v365 = vsub.f32 %v54, %v364
  %366 = vmatpush1.xpose.msra.mxu0 %v365
  %367 = vmatprep.subr.mxu0 0.0
  %v368 = vand.u32 %v57, 4294901760
  %v369 = vsub.f32 %v57, %v368
  %370 = vmatpush1.xpose.msra.mxu0 %v369
  %371 = vmatprep.subr.mxu0 0.0
  %v372 = vand.u32 %v60, 4294901760
  %v373 = vsub.f32 %v60, %v372
  %374 = vmatpush1.xpose.msra.mxu0 %v373
  %375 = vmatprep.subr.mxu0 0.0
  %v376 = vand.u32 %v63, 4294901760
  %v377 = vsub.f32 %v63, %v376
  %378 = vmatpush1.xpose.msra.mxu0 %v377
  %379 = vmatprep.subr.mxu0 0.0
  %v380 = vand.u32 %v66, 4294901760
  %v381 = vsub.f32 %v66, %v380
  %382 = vmatpush1.xpose.msra.mxu0 %v381
  %383 = vmatprep.subr.mxu0 0.0
  %v384 = vand.u32 %v69, 4294901760
  %v385 = vsub.f32 %v69, %v384
  %386 = vmatpush1.xpose.msra.mxu0 %v385
  %387 = vmatprep.subr.mxu0 0.0
  %v388 = vand.u32 %v72, 4294901760
  %v389 = vsub.f32 %v72, %v388
  %390 = vmatpush1.xpose.msra.mxu0 %v389
  %391 = vmatprep.subr.mxu0 0.0
  %v392 = vand.u32 %v75, 4294901760
  %v393 = vsub.f32 %v75, %v392
  %394 = vmatpush1.xpose.msra.mxu0 %v393
  %395 = vmatprep.subr.mxu0 0.0
  %v396 = vand.u32 %v78, 4294901760
  %v397 = vsub.f32 %v78, %v396
  %398 = vmatpush1.xpose.msra.mxu0 %v397
  %399 = vmatprep.subr.mxu0 0.0
  %v400 = vand.u32 %v81, 4294901760
  %v401 = vsub.f32 %v81, %v400
  %402 = vmatpush1.xpose.msra.mxu0 %v401
  %403 = vmatprep.subr.mxu0 0.0
  %v404 = vand.u32 %v84, 4294901760
  %v405 = vsub.f32 %v84, %v404
  %406 = vmatpush1.xpose.msra.mxu0 %v405
  %407 = vmatprep.subr.mxu0 0.0
  %v408 = vand.u32 %v87, 4294901760
  %v409 = vsub.f32 %v87, %v408
  %410 = vmatpush1.xpose.msra.mxu0 %v409
  %411 = vmatprep.subr.mxu0 0.0
  %412 = vmatpush1.xpose.msra.mxu0 0.0
  %413 = vmatprep.subr.mxu0 0.0
  %414 = vmatpush1.xpose.msra.mxu0 0.0
  %415 = vmatprep.subr.mxu0 0.0
  %416 = vmatpush1.xpose.msra.mxu0 0.0
  %417 = vmatprep.subr.mxu0 0.0
  %418 = vmatpush1.xpose.msra.mxu0 0.0
  %419 = vmatprep.subr.mxu0 0.0
  %420 = vmatpush1.xpose.msra.mxu0 0.0
  %421 = vmatprep.subr.mxu0 0.0
  %422 = vmatpush1.xpose.msra.mxu0 0.0
  %423 = vmatprep.subr.mxu0 0.0
  %424 = vmatpush1.xpose.msra.mxu0 0.0
  %425 = vmatprep.subr.mxu0 0.0
  %426 = vmatpush1.xpose.msra.mxu0 0.0
  %427 = vmatprep.subr.mxu0 0.0
  %428 = vmatpush1.xpose.msra.mxu0 0.0
  %429 = vmatprep.subr.mxu0 0.0
  %430 = vmatpush1.xpose.msra.mxu0 0.0
  %431 = vmatprep.subr.mxu0 0.0
  %432 = vmatpush1.xpose.msra.mxu0 0.0
  %433 = vmatprep.subr.mxu0 0.0
  %434 = vmatpush1.xpose.msra.mxu0 0.0
  %435 = vmatprep.subr.mxu0 0.0
  %436 = vmatpush1.xpose.msra.mxu0 0.0
  %437 = vmatprep.subr.mxu0 0.0
  %438 = vmatpush1.xpose.msra.mxu0 0.0
  %439 = vmatprep.subr.mxu0 0.0
  %440 = vmatpush1.xpose.msra.mxu0 0.0
  %441 = vmatprep.subr.mxu0 0.0
  %442 = vmatpush1.xpose.msra.mxu0 0.0
  %443 = vmatprep.mubr.f32.mxu0 0.0
  %v444 = vand.u32 %v36, 4294901760
  %v445 = vsub.f32 %v36, %v444
  %446 = vmatmul.mubr.f32.gmra.mrb[0].mxu0 %v445
  %v447 = vpop.f32.mrb[0].mxu0
  %v448 = vadd.f32 %v338, %v447
  %v449 = vpop.f32.mrb[0].mxu0
  %450 = vmatprep.mubr.f32.mxu0 0.0
  %v451 = vand.u32 %v39, 4294901760
  %v452 = vsub.f32 %v39, %v451
  %453 = vmatmul.mubr.f32.gmra.mrb[0].mxu0 %v452
  %v454 = vpop.f32.mrb[0].mxu0
  %v455 = vadd.f32 %v344, %v454
  %v456 = vpop.f32.mrb[0].mxu0
  %457 = vdwg.mxu0
  %458 = vmatprep.subr.mxu0 0.0
  %v459 = vand.u32 %v42, 4294901760
  %460 = vmatpush1.xpose.msra.mxu0 %v459
  %461 = vmatprep.subr.mxu0 0.0
  %v462 = vand.u32 %v45, 4294901760
  %463 = vmatpush1.xpose.msra.mxu0 %v462
  %464 = vmatprep.subr.mxu0 0.0
  %v465 = vand.u32 %v48, 4294901760
  %466 = vmatpush1.xpose.msra.mxu0 %v465
  %467 = vmatprep.subr.mxu0 0.0
  %v468 = vand.u32 %v51, 4294901760
  %469 = vmatpush1.xpose.msra.mxu0 %v468
  %470 = vmatprep.subr.mxu0 0.0
  %v471 = vand.u32 %v54, 4294901760
  %472 = vmatpush1.xpose.msra.mxu0 %v471
  %473 = vmatprep.subr.mxu0 0.0
  %v474 = vand.u32 %v57, 4294901760
  %475 = vmatpush1.xpose.msra.mxu0 %v474
  %476 = vmatprep.subr.mxu0 0.0
  %v477 = vand.u32 %v60, 4294901760
  %478 = vmatpush1.xpose.msra.mxu0 %v477
  %479 = vmatprep.subr.mxu0 0.0
  %v480 = vand.u32 %v63, 4294901760
  %481 = vmatpush1.xpose.msra.mxu0 %v480
  %482 = vmatprep.subr.mxu0 0.0
  %v483 = vand.u32 %v66, 4294901760
  %484 = vmatpush1.xpose.msra.mxu0 %v483
  %485 = vmatprep.subr.mxu0 0.0
  %v486 = vand.u32 %v69, 4294901760
  %487 = vmatpush1.xpose.msra.mxu0 %v486
  %488 = vmatprep.subr.mxu0 0.0
  %v489 = vand.u32 %v72, 4294901760
  %490 = vmatpush1.xpose.msra.mxu0 %v489
  %491 = vmatprep.subr.mxu0 0.0
  %v492 = vand.u32 %v75, 4294901760
  %493 = vmatpush1.xpose.msra.mxu0 %v492
  %494 = vmatprep.subr.mxu0 0.0
  %v495 = vand.u32 %v78, 4294901760
  %496 = vmatpush1.xpose.msra.mxu0 %v495
  %497 = vmatprep.subr.mxu0 0.0
  %v498 = vand.u32 %v81, 4294901760
  %499 = vmatpush1.xpose.msra.mxu0 %v498
  %500 = vmatprep.subr.mxu0 0.0
  %v501 = vand.u32 %v84, 4294901760
  %502 = vmatpush1.xpose.msra.mxu0 %v501
  %503 = vmatprep.subr.mxu0 0.0
  %v504 = vand.u32 %v87, 4294901760
  %505 = vmatpush1.xpose.msra.mxu0 %v504
  %506 = vmatprep.subr.mxu0 0.0
  %507 = vmatpush1.xpose.msra.mxu0 0.0
  %508 = vmatprep.subr.mxu0 0.0
  %509 = vmatpush1.xpose.msra.mxu0 0.0
  %510 = vmatprep.subr.mxu0 0.0
  %511 = vmatpush1.xpose.msra.mxu0 0.0
  %512 = vmatprep.subr.mxu0 0.0
  %513 = vmatpush1.xpose.msra.mxu0 0.0
  %514 = vmatprep.subr.mxu0 0.0
  %515 = vmatpush1.xpose.msra.mxu0 0.0
  %516 = vmatprep.subr.mxu0 0.0
  %517 = vmatpush1.xpose.msra.mxu0 0.0
  %518 = vmatprep.subr.mxu0 0.0
  %519 = vmatpush1.xpose.msra.mxu0 0.0
  %520 = vmatprep.subr.mxu0 0.0
  %521 = vmatpush1.xpose.msra.mxu0 0.0
  %522 = vmatprep.subr.mxu0 0.0
  %523 = vmatpush1.xpose.msra.mxu0 0.0
  %524 = vmatprep.subr.mxu0 0.0
  %525 = vmatpush1.xpose.msra.mxu0 0.0
  %526 = vmatprep.subr.mxu0 0.0
  %527 = vmatpush1.xpose.msra.mxu0 0.0
  %528 = vmatprep.subr.mxu0 0.0
  %529 = vmatpush1.xpose.msra.mxu0 0.0
  %530 = vmatprep.subr.mxu0 0.0
  %531 = vmatpush1.xpose.msra.mxu0 0.0
  %532 = vmatprep.subr.mxu0 0.0
  %533 = vmatpush1.xpose.msra.mxu0 0.0
  %534 = vmatprep.subr.mxu0 0.0
  %535 = vmatpush1.xpose.msra.mxu0 0.0
  %536 = vmatprep.subr.mxu0 0.0
  %537 = vmatpush1.xpose.msra.mxu0 0.0
  %538 = vmatprep.mubr.f32.mxu0 0.0
  %v539 = vand.u32 %v36, 4294901760
  %v540 = vsub.f32 %v36, %v539
  %v541 = vand.u32 %v540, 4294901760
  %542 = vmatmul.mubr.f32.gmra.mrb[0].mxu0 %v541
  %v543 = vpop.f32.mrb[0].mxu0
  %v544 = vadd.f32 %v448, %v543
  %v545 = vpop.f32.mrb[0].mxu0
  %546 = vmatprep.mubr.f32.mxu0 0.0
  %v547 = vand.u32 %v39, 4294901760
  %v548 = vsub.f32 %v39, %v547
  %v549 = vand.u32 %v548, 4294901760
  %550 = vmatmul.mubr.f32.gmra.mrb[0].mxu0 %v549
  %v551 = vpop.f32.mrb[0].mxu0
  %v552 = vadd.f32 %v455, %v551
  %v553 = vpop.f32.mrb[0].mxu0
  %554 = vdwg.mxu0
  %555 = vmatprep.subr.mxu0 0.0
  %v556 = vand.u32 %v42, 4294901760
  %v557 = vsub.f32 %v42, %v556
  %v558 = vand.u32 %v557, 4294901760
  %559 = vmatpush1.xpose.msra.mxu0 %v558
  %560 = vmatprep.subr.mxu0 0.0
  %v561 = vand.u32 %v45, 4294901760
  %v562 = vsub.f32 %v45, %v561
  %v563 = vand.u32 %v562, 4294901760
  %564 = vmatpush1.xpose.msra.mxu0 %v563
  %565 = vmatprep.subr.mxu0 0.0
  %v566 = vand.u32 %v48, 4294901760
  %v567 = vsub.f32 %v48, %v566
  %v568 = vand.u32 %v567, 4294901760
  %569 = vmatpush1.xpose.msra.mxu0 %v568
  %570 = vmatprep.subr.mxu0 0.0
  %v571 = vand.u32 %v51, 4294901760
  %v572 = vsub.f32 %v51, %v571
  %v573 = vand.u32 %v572, 4294901760
  %574 = vmatpush1.xpose.msra.mxu0 %v573
  %575 = vmatprep.subr.mxu0 0.0
  %v576 = vand.u32 %v54, 4294901760
  %v577 = vsub.f32 %v54, %v576
  %v578 = vand.u32 %v577, 4294901760
  %579 = vmatpush1.xpose.msra.mxu0 %v578
  %580 = vmatprep.subr.mxu0 0.0
  %v581 = vand.u32 %v57, 4294901760
  %v582 = vsub.f32 %v57, %v581
  %v583 = vand.u32 %v582, 4294901760
  %584 = vmatpush1.xpose.msra.mxu0 %v583
  %585 = vmatprep.subr.mxu0 0.0
  %v586 = vand.u32 %v60, 4294901760
  %v587 = vsub.f32 %v60, %v586
  %v588 = vand.u32 %v587, 4294901760
  %589 = vmatpush1.xpose.msra.mxu0 %v588
  %590 = vmatprep.subr.mxu0 0.0
  %v591 = vand.u32 %v63, 4294901760
  %v592 = vsub.f32 %v63, %v591
  %v593 = vand.u32 %v592, 4294901760
  %594 = vmatpush1.xpose.msra.mxu0 %v593
  %595 = vmatprep.subr.mxu0 0.0
  %v596 = vand.u32 %v66, 4294901760
  %v597 = vsub.f32 %v66, %v596
  %v598 = vand.u32 %v597, 4294901760
  %599 = vmatpush1.xpose.msra.mxu0 %v598
  %600 = vmatprep.subr.mxu0 0.0
  %v601 = vand.u32 %v69, 4294901760
  %v602 = vsub.f32 %v69, %v601
  %v603 = vand.u32 %v602, 4294901760
  %604 = vmatpush1.xpose.msra.mxu0 %v603
  %605 = vmatprep.subr.mxu0 0.0
  %v606 = vand.u32 %v72, 4294901760
  %v607 = vsub.f32 %v72, %v606
  %v608 = vand.u32 %v607, 4294901760
  %609 = vmatpush1.xpose.msra.mxu0 %v608
  %610 = vmatprep.subr.mxu0 0.0
  %v611 = vand.u32 %v75, 4294901760
  %v612 = vsub.f32 %v75, %v611
  %v613 = vand.u32 %v612, 4294901760
  %614 = vmatpush1.xpose.msra.mxu0 %v613
  %615 = vmatprep.subr.mxu0 0.0
  %v616 = vand.u32 %v78, 4294901760
  %v617 = vsub.f32 %v78, %v616
  %v618 = vand.u32 %v617, 4294901760
  %619 = vmatpush1.xpose.msra.mxu0 %v618
  %620 = vmatprep.subr.mxu0 0.0
  %v621 = vand.u32 %v81, 4294901760
  %v622 = vsub.f32 %v81, %v621
  %v623 = vand.u32 %v622, 4294901760
  %624 = vmatpush1.xpose.msra.mxu0 %v623
  %625 = vmatprep.subr.mxu0 0.0
  %v626 = vand.u32 %v84, 4294901760
  %v627 = vsub.f32 %v84, %v626
  %v628 = vand.u32 %v627, 4294901760
  %629 = vmatpush1.xpose.msra.mxu0 %v628
  %630 = vmatprep.subr.mxu0 0.0
  %v631 = vand.u32 %v87, 4294901760
  %v632 = vsub.f32 %v87, %v631
  %v633 = vand.u32 %v632, 4294901760
  %634 = vmatpush1.xpose.msra.mxu0 %v633
  %635 = vmatprep.subr.mxu0 0.0
  %636 = vmatpush1.xpose.msra.mxu0 0.0
  %637 = vmatprep.subr.mxu0 0.0
  %638 = vmatpush1.xpose.msra.mxu0 0.0
  %639 = vmatprep.subr.mxu0 0.0
  %640 = vmatpush1.xpose.msra.mxu0 0.0
  %641 = vmatprep.subr.mxu0 0.0
  %642 = vmatpush1.xpose.msra.mxu0 0.0
  %643 = vmatprep.subr.mxu0 0.0
  %644 = vmatpush1.xpose.msra.mxu0 0.0
  %645 = vmatprep.subr.mxu0 0.0
  %646 = vmatpush1.xpose.msra.mxu0 0.0
  %647 = vmatprep.subr.mxu0 0.0
  %648 = vmatpush1.xpose.msra.mxu0 0.0
  %649 = vmatprep.subr.mxu0 0.0
  %650 = vmatpush1.xpose.msra.mxu0 0.0
  %651 = vmatprep.subr.mxu0 0.0
  %652 = vmatpush1.xpose.msra.mxu0 0.0
  %653 = vmatprep.subr.mxu0 0.0
  %654 = vmatpush1.xpose.msra.mxu0 0.0
  %655 = vmatprep.subr.mxu0 0.0
  %656 = vmatpush1.xpose.msra.mxu0 0.0
  %657 = vmatprep.subr.mxu0 0.0
  %658 = vmatpush1.xpose.msra.mxu0 0.0
  %659 = vmatprep.subr.mxu0 0.0
  %660 = vmatpush1.xpose.msra.mxu0 0.0
  %661 = vmatprep.subr.mxu0 0.0
  %662 = vmatpush1.xpose.msra.mxu0 0.0
  %663 = vmatprep.subr.mxu0 0.0
  %664 = vmatpush1.xpose.msra.mxu0 0.0
  %665 = vmatprep.subr.mxu0 0.0
  %666 = vmatpush1.xpose.msra.mxu0 0.0
  %667 = vmatprep.mubr.f32.mxu0 0.0
  %v668 = vand.u32 %v36, 4294901760
  %669 = vmatmul.mubr.f32.gmra.mrb[0].mxu0 %v668
  %v670 = vpop.f32.mrb[0].mxu0
  %v671 = vadd.f32 %v544, %v670
  %v672 = vpop.f32.mrb[0].mxu0
  %673 = vmatprep.mubr.f32.mxu0 0.0
  %v674 = vand.u32 %v39, 4294901760
  %675 = vmatmul.mubr.f32.gmra.mrb[0].mxu0 %v674
  %v676 = vpop.f32.mrb[0].mxu0
  %v677 = vadd.f32 %v552, %v676
  %v678 = vpop.f32.mrb[0].mxu0
  %679 = vdwg.mxu0
  %680 = vmatprep.subr.mxu0 0.0
  %v681 = vand.u32 %v42, 4294901760
  %682 = vmatpush1.xpose.msra.mxu0 %v681
  %683 = vmatprep.subr.mxu0 0.0
  %v684 = vand.u32 %v45, 4294901760
  %685 = vmatpush1.xpose.msra.mxu0 %v684
  %686 = vmatprep.subr.mxu0 0.0
  %v687 = vand.u32 %v48, 4294901760
  %688 = vmatpush1.xpose.msra.mxu0 %v687
  %689 = vmatprep.subr.mxu0 0.0
  %v690 = vand.u32 %v51, 4294901760
  %691 = vmatpush1.xpose.msra.mxu0 %v690
  %692 = vmatprep.subr.mxu0 0.0
  %v693 = vand.u32 %v54, 4294901760
  %694 = vmatpush1.xpose.msra.mxu0 %v693
  %695 = vmatprep.subr.mxu0 0.0
  %v696 = vand.u32 %v57, 4294901760
  %697 = vmatpush1.xpose.msra.mxu0 %v696
  %698 = vmatprep.subr.mxu0 0.0
  %v699 = vand.u32 %v60, 4294901760
  %700 = vmatpush1.xpose.msra.mxu0 %v699
  %701 = vmatprep.subr.mxu0 0.0
  %v702 = vand.u32 %v63, 4294901760
  %703 = vmatpush1.xpose.msra.mxu0 %v702
  %704 = vmatprep.subr.mxu0 0.0
  %v705 = vand.u32 %v66, 4294901760
  %706 = vmatpush1.xpose.msra.mxu0 %v705
  %707 = vmatprep.subr.mxu0 0.0
  %v708 = vand.u32 %v69, 4294901760
  %709 = vmatpush1.xpose.msra.mxu0 %v708
  %710 = vmatprep.subr.mxu0 0.0
  %v711 = vand.u32 %v72, 4294901760
  %712 = vmatpush1.xpose.msra.mxu0 %v711
  %713 = vmatprep.subr.mxu0 0.0
  %v714 = vand.u32 %v75, 4294901760
  %715 = vmatpush1.xpose.msra.mxu0 %v714
  %716 = vmatprep.subr.mxu0 0.0
  %v717 = vand.u32 %v78, 4294901760
  %718 = vmatpush1.xpose.msra.mxu0 %v717
  %719 = vmatprep.subr.mxu0 0.0
  %v720 = vand.u32 %v81, 4294901760
  %721 = vmatpush1.xpose.msra.mxu0 %v720
  %722 = vmatprep.subr.mxu0 0.0
  %v723 = vand.u32 %v84, 4294901760
  %724 = vmatpush1.xpose.msra.mxu0 %v723
  %725 = vmatprep.subr.mxu0 0.0
  %v726 = vand.u32 %v87, 4294901760
  %727 = vmatpush1.xpose.msra.mxu0 %v726
  %728 = vmatprep.subr.mxu0 0.0
  %729 = vmatpush1.xpose.msra.mxu0 0.0
  %730 = vmatprep.subr.mxu0 0.0
  %731 = vmatpush1.xpose.msra.mxu0 0.0
  %732 = vmatprep.subr.mxu0 0.0
  %733 = vmatpush1.xpose.msra.mxu0 0.0
  %734 = vmatprep.subr.mxu0 0.0
  %735 = vmatpush1.xpose.msra.mxu0 0.0
  %736 = vmatprep.subr.mxu0 0.0
  %737 = vmatpush1.xpose.msra.mxu0 0.0
  %738 = vmatprep.subr.mxu0 0.0
  %739 = vmatpush1.xpose.msra.mxu0 0.0
  %740 = vmatprep.subr.mxu0 0.0
  %741 = vmatpush1.xpose.msra.mxu0 0.0
  %742 = vmatprep.subr.mxu0 0.0
  %743 = vmatpush1.xpose.msra.mxu0 0.0
  %744 = vmatprep.subr.mxu0 0.0
  %745 = vmatpush1.xpose.msra.mxu0 0.0
  %746 = vmatprep.subr.mxu0 0.0
  %747 = vmatpush1.xpose.msra.mxu0 0.0
  %748 = vmatprep.subr.mxu0 0.0
  %749 = vmatpush1.xpose.msra.mxu0 0.0
  %750 = vmatprep.subr.mxu0 0.0
  %751 = vmatpush1.xpose.msra.mxu0 0.0
  %752 = vmatprep.subr.mxu0 0.0
  %753 = vmatpush1.xpose.msra.mxu0 0.0
  %754 = vmatprep.subr.mxu0 0.0
  %755 = vmatpush1.xpose.msra.mxu0 0.0
  %756 = vmatprep.subr.mxu0 0.0
  %757 = vmatpush1.xpose.msra.mxu0 0.0
  %758 = vmatprep.subr.mxu0 0.0
  %759 = vmatpush1.xpose.msra.mxu0 0.0
  %760 = vmatprep.mubr.f32.mxu0 0.0
  %v761 = vand.u32 %v36, 4294901760
  %762 = vmatmul.mubr.f32.gmra.mrb[0].mxu0 %v761
  %v763 = vpop.f32.mrb[0].mxu0
  %v764 = vadd.f32 %v671, %v763
  %v765 = vpop.f32.mrb[0].mxu0
  %766 = vmatprep.mubr.f32.mxu0 0.0
  %v767 = vand.u32 %v39, 4294901760
  %768 = vmatmul.mubr.f32.gmra.mrb[0].mxu0 %v767
  %v769 = vpop.f32.mrb[0].mxu0
  %v770 = vadd.f32 %v677, %v769
  %v771 = vpop.f32.mrb[0].mxu0
  %772 = vdwg.mxu0
  %v773 = vsub.f32 1.0, %v764
  %v774 = vsub.f32 1.0, %v770
  %v775 = vmul.f32 %v773, 0.5
  %v776 = vmul.f32 %v774, 0.5
  %v777 = vmax.f32 %v775, 0.0
  %v778 = vmax.f32 %v776, 0.0
  %v779 = vmin.f32 %v777, 1.0
  %v780 = vmin.f32 %v778, 1.0
  %v781 = vrsqrt.pop %v779
  %v782 = vmul.f32 %v779, %v781
  %vm783 = vcmp.eq.f32.partialorder %v779, inf
  %v784 = vsel %vm783, %v779, %v782
  %vm785 = vcmp.eq.f32.partialorder %v779, 0.0
  %v786 = vand.u32 %v779, 2147483648
  %v787 = vsel %vm785, %v786, %v784
  %v788 = vrsqrt.pop %v780
  %v789 = vmul.f32 %v780, %v788
  %vm790 = vcmp.eq.f32.partialorder %v780, inf
  %v791 = vsel %vm790, %v780, %v789
  %vm792 = vcmp.eq.f32.partialorder %v780, 0.0
  %v793 = vand.u32 %v780, 2147483648
  %v794 = vsel %vm792, %v793, %v791
  %vm795 = vcmp.gt.f32.partialorder %v787, 0.5
  %vm796 = vcmp.gt.f32.partialorder %v794, 0.5
  %v797 = vsub.f32 1.0, %v787
  %v798 = vsub.f32 1.0, %v794
  %v799 = vmul.f32 %v797, 0.5
  %v800 = vmul.f32 %v798, 0.5
  %v801 = vmul.f32 %v787, %v787
  %v802 = vmul.f32 %v794, %v794
  %v803 = vsel %vm795, %v799, %v801
  %v804 = vsel %vm796, %v800, %v802
  %v805 = vrsqrt.pop %v803
  %v806 = vmul.f32 %v803, %v805
  %vm807 = vcmp.eq.f32.partialorder %v803, inf
  %v808 = vsel %vm807, %v803, %v806
  %vm809 = vcmp.eq.f32.partialorder %v803, 0.0
  %v810 = vand.u32 %v803, 2147483648
  %v811 = vsel %vm809, %v810, %v808
  %v812 = vrsqrt.pop %v804
  %v813 = vmul.f32 %v804, %v812
  %vm814 = vcmp.eq.f32.partialorder %v804, inf
  %v815 = vsel %vm814, %v804, %v813
  %vm816 = vcmp.eq.f32.partialorder %v804, 0.0
  %v817 = vand.u32 %v804, 2147483648
  %v818 = vsel %vm816, %v817, %v815
  %v819 = vsel %vm795, %v811, %v787
  %v820 = vsel %vm796, %v818, %v794
  %v821 = vmul.f32 %v803, 0.0421632
  %v822 = vmul.f32 %v804, 0.0421632
  %v823 = vadd.f32 %v821, 0.024181312
  %v824 = vadd.f32 %v822, 0.024181312
  %v825 = vmul.f32 %v823, %v803
  %v826 = vmul.f32 %v824, %v804
  %v827 = vadd.f32 %v825, 0.045470025
  %v828 = vadd.f32 %v826, 0.045470025
  %v829 = vmul.f32 %v827, %v803
  %v830 = vmul.f32 %v828, %v804
  %v831 = vadd.f32 %v829, 0.074953005
  %v832 = vadd.f32 %v830, 0.074953005
  %v833 = vmul.f32 %v831, %v803
  %v834 = vmul.f32 %v832, %v804
  %v835 = vadd.f32 %v833, 0.16666752
  %v836 = vadd.f32 %v834, 0.16666752
  %v837 = vmul.f32 %v835, %v803
  %v838 = vmul.f32 %v836, %v804
  %v839 = vmul.f32 %v837, %v819
  %v840 = vmul.f32 %v838, %v820
  %v841 = vadd.f32 %v839, %v819
  %v842 = vadd.f32 %v840, %v820
  %v843 = vmul.f32 %v841, 2.0
  %v844 = vmul.f32 %v842, 2.0
  %v845 = vsub.f32 1.5707964, %v843
  %v846 = vsub.f32 1.5707964, %v844
  %v847 = vsel %vm795, %v845, %v841
  %v848 = vsel %vm796, %v846, %v842
  %v849 = vmul.f32 %v847, 2.0
  %v850 = vmul.f32 %v848, 2.0
  %v851 = vmul.f32 %v849, %v847
  %v852 = vmul.f32 %v850, %v848
  %v853 = vlaneseq
  %v854 = vshrl.u32 %v853, 7
  %v855 = vadd.s32 %v854, 8
  %s856 = smul.u32 0, 16
  %v857 = vstv %s856
  %v858 = vadd.s32 %v854, %v857
  %v859 = vadd.s32 %v855, %v857
  %v860 = vlaneseq
  %v861 = vand.u32 %v860, 127
  %s862 = smul.u32 0, 128
  %v863 = vstv %s862
  %v864 = vadd.s32 %v861, %v863
  %vm865 = vcmp.lt.s32.totalorder %v858, 13
  %vm866 = vcmp.lt.s32.totalorder %v859, 13
  %vm867 = vcmp.lt.s32.totalorder %v864, 6
  %vm868 = vmand %vm865, %vm867
  %vm869 = vmand %vm866, %vm867
  %v870 = vsel %vm868, %v851, 0.0
  %v871 = vsel %vm869, %v852, 0.0
  %v872 = vadd.f32 %v870, %v871
  %v873 = vld [vmem:[%s2] sm:$0xff]
  %v874 = vadd.f32 %v873, %v872
  %875 = vst [vmem:[%s2] sm:$0xff] %v874
  // Predicated region
  $region14: #{prompt_forward.1} parent=0 // pred_check
    _
  $region15: #{prompt_forward.1} parent=0 // pred_check_branch
    %877 = sbr.rel (0) target = $region17
  $region16: #{prompt_forward.1} parent=0 // pred_region
    _
  $region17: #{prompt_forward.1} parent=0 // pred_fallthru
    _
  // Predicated region
  $region18: #{prompt_forward.1} parent=0 // pred_check
    _
  $region19: #{prompt_forward.1} parent=0 // pred_check_branch
    %879 = sbr.rel (0) target = $region21
  $region20: #{prompt_forward.1} parent=0 // pred_region
    _
  $region21: #{prompt_forward.1} parent=0 // pred_fallthru
    _

</llo_original>
